<compile_context>
chip_gen: v6e
topology: v6e:2x2x1
jax: 0.10.0
libtpu: 0.0.40
codegen_flags: <defaults>
</compile_context>

<pallas_src>
import jax
import jax.numpy as jnp
from jax.experimental import pallas as pl
from jax.experimental.pallas import tpu as pltpu

LANE = 128
MAX_BLOCK_ROWS = 4096                   # (4096, 128) f32 block = 2 MiB per stream
VMEM_LIMIT_BYTES = 48 * 1024 * 1024     # <=4 streams x 2 bufs x 2 MiB + temps, < 64 MiB/TC (v7x)

_CORE_PARALLEL = getattr(pltpu, "CORE_PARALLEL", pltpu.PARALLEL)


def _round_up(x, m):
    return ((x + m - 1) // m) * m


def _ceil_div(a, b):
    return -(-a // b)


def _num_tensorcores():
    """2-way grid split only on chips exposing two TensorCores to one program (v7x)."""
    try:
        kind = jax.devices()[0].device_kind.lower()
    except Exception:
        return 1
    return 2 if ("v7" in kind or "7x" in kind) else 1


# ------------------------------ layout helpers ------------------------------ #

def _to_lane_slab(x):
    """Flatten to a lane-dense (rows, 128) slab.

    Zero-copy when size % 128 == 0; otherwise a single minimal pad-to-lane copy
    (zeros => zero contribution).  Ragged *rows* are never padded — they are
    masked inside the kernel.
    """
    flat = x.reshape(-1)
    n = flat.shape[0]
    rows = _ceil_div(n, LANE)
    if rows * LANE != n:
        # TODO(synk): handle the <128-element lane tail separately to avoid this
        # full copy when size % 128 != 0.
        flat = jnp.pad(flat, (0, rows * LANE - n))
    return flat.reshape(rows, LANE), rows


def _plan(rows, splits):
    """Pick (splits, block_rows, steps) for the (splits, steps) reduction grid."""
    if splits > 1:
        per = _ceil_div(rows, splits)
        block_rows = min(MAX_BLOCK_ROWS, _round_up(per, 8))
        steps = _ceil_div(per, block_rows)
        if steps * block_rows < rows:   # second core starts in-bounds
            return splits, block_rows, steps
    block_rows = min(MAX_BLOCK_ROWS, _round_up(max(rows, 1), 8))
    steps = _ceil_div(max(rows, 1), block_rows)
    return 1, block_rows, steps


# ----------------------------- Pallas kernels ------------------------------ #

def _make_reduce_kernel(*, weighted, block_rows, steps, rows_total, needs_mask):
    """Reduction kernel: accumulate [w*] (p-t)^2 into an (8,128) vreg accumulator."""
    folds = block_rows // 8

    def kernel(*refs):
        if weighted:
            p_ref, t_ref, w_ref, sq_out, w_out, acc_sq, acc_w = refs
        else:
            p_ref, t_ref, sq_out, acc_sq = refs
            w_ref = w_out = acc_w = None

        c = pl.program_id(0)
        i = pl.program_id(1)

        @pl.when(i == 0)
        def _():
            acc_sq[...] = jnp.zeros_like(acc_sq)
            if weighted:
                acc_w[...] = jnp.zeros_like(acc_w)

        d = p_ref[...].astype(jnp.float32) - t_ref[...].astype(jnp.float32)
        if weighted:
            w = w_ref[...].astype(jnp.float32)
            sq = d * d * w
        else:
            w = None
            sq = d * d

        if needs_mask:
            # Logical (unclamped) start row of this grid step; rows past the true
            # slab extent (ragged last block / clamped duplicate blocks) give 0.
            start = (c * steps + i) * block_rows
            row = start + jax.lax.broadcasted_iota(jnp.int32, (block_rows, LANE), 0)
            valid = row < rows_total
            sq = jnp.where(valid, sq, 0.0)
            if weighted:
                w = jnp.where(valid, w, 0.0)

        # Fold the block into a single (8,128) accumulator: sublane-aligned
        # reshape -> vreg-wise VPU adds only, hidden under the HBM DMA.
        acc_sq[...] += sq.reshape(folds, 8, LANE).sum(axis=0)
        if weighted:
            acc_w[...] += w.reshape(folds, 8, LANE).sum(axis=0)

        @pl.when(i == pl.num_programs(1) - 1)
        def _():
            sq_out[...] = jnp.sum(acc_sq[...]).reshape(1, 1, 1)
            if weighted:
                w_out[...] = jnp.sum(acc_w[...]).reshape(1, 1, 1)

    return kernel


def _mse_elem_kernel(p_ref, t_ref, o_ref):
    """Elementwise (p - t)^2 for reduction='none', no weight."""
    d = p_ref[...].astype(jnp.float32) - t_ref[...].astype(jnp.float32)
    o_ref[...] = (d * d).astype(o_ref.dtype)


def _mse_elem_w_kernel(p_ref, t_ref, w_ref, o_ref):
    """Elementwise w * (p - t)^2 for reduction='none'."""
    d = p_ref[...].astype(jnp.float32) - t_ref[...].astype(jnp.float32)
    o_ref[...] = (d * d * w_ref[...].astype(jnp.float32)).astype(o_ref.dtype)


# ------------------------------ pallas_call glue ----------------------------- #

def _reduce(p2, t2, w2, *, splits, block_rows, steps, rows_total):
    weighted = w2 is not None
    total_blocks = _ceil_div(rows_total, block_rows)
    needs_mask = (splits * steps * block_rows != rows_total)
    clamp = (splits * steps > total_blocks)   # avoid fully out-of-bounds DMAs
    last_block = total_blocks - 1

    if clamp:
        def idx_map(c, i):
            return (jnp.minimum(c * steps + i, last_block), 0)
    else:
        def idx_map(c, i):
            return (c * steps + i, 0)

    in_spec = pl.BlockSpec((block_rows, LANE), idx_map)
    out_spec = pl.BlockSpec((1, 1, 1), lambda c, i: (c, 0, 0))

    kernel = _make_reduce_kernel(weighted=weighted, block_rows=block_rows,
                                 steps=steps, rows_total=rows_total,
                                 needs_mask=needs_mask)

    isz = jnp.dtype(p2.dtype).itemsize
    n_elems = rows_total * LANE
    core_sem = _CORE_PARALLEL if splits > 1 else pltpu.ARBITRARY
    params = pltpu.CompilerParams(
        dimension_semantics=(core_sem, pltpu.ARBITRARY),
        vmem_limit_bytes=VMEM_LIMIT_BYTES)

    if weighted:
        out_shape = (jax.ShapeDtypeStruct((splits, 1, 1), jnp.float32),
                     jax.ShapeDtypeStruct((splits, 1, 1), jnp.float32))
        out_specs = [out_spec, out_spec]
        in_specs = [in_spec, in_spec, in_spec]
        scratch = [pltpu.VMEM((8, LANE), jnp.float32),
                   pltpu.VMEM((8, LANE), jnp.float32)]
        cost = pl.CostEstimate(flops=5 * n_elems, transcendentals=0,
                               bytes_accessed=3 * n_elems * isz)
        args = (p2, t2, w2)
    else:
        out_shape = jax.ShapeDtypeStruct((splits, 1, 1), jnp.float32)
        out_specs = out_spec
        in_specs = [in_spec, in_spec]
        scratch = [pltpu.VMEM((8, LANE), jnp.float32)]
        cost = pl.CostEstimate(flops=3 * n_elems, transcendentals=0,
                               bytes_accessed=2 * n_elems * isz)
        args = (p2, t2)

    out = pl.pallas_call(
        kernel,
        out_shape=out_shape,
        grid_spec=pltpu.PrefetchScalarGridSpec(
            num_scalar_prefetch=0,
            grid=(splits, steps),
            in_specs=in_specs,
            out_specs=out_specs,
            scratch_shapes=scratch),
        compiler_params=params,
        cost_estimate=cost,
    )(*args)

    if weighted:
        sq_parts, w_parts = out
        return jnp.sum(sq_parts), jnp.sum(w_parts)
    return jnp.sum(out)


def _elementwise(p2, t2, w2, out_dtype):
    # TODO(synk): add a CORE_PARALLEL leading split for v7x on this path too
    # (needs an exactly-divisible grid so output blocks are never revisited).
    rows = p2.shape[0]
    block_rows = min(MAX_BLOCK_ROWS, _round_up(rows, 8))
    steps = _ceil_div(rows, block_rows)
    spec = pl.BlockSpec((block_rows, LANE), lambda i: (i, 0))

    if w2 is None:
        kernel, args, in_specs, n_streams = _mse_elem_kernel, (p2, t2), [spec, spec], 3
    else:
        kernel, args, in_specs, n_streams = (_mse_elem_w_kernel, (p2, t2, w2),
                                             [spec, spec, spec], 4)

    isz = jnp.dtype(p2.dtype).itemsize
    cost = pl.CostEstimate(flops=3 * rows * LANE, transcendentals=0,
                           bytes_accessed=n_streams * rows * LANE * isz)
    return pl.pallas_call(
        kernel,
        out_shape=jax.ShapeDtypeStruct((rows, LANE), out_dtype),
        grid_spec=pltpu.PrefetchScalarGridSpec(
            num_scalar_prefetch=0,
            grid=(steps,),
            in_specs=in_specs,
            out_specs=spec),
        compiler_params=pltpu.CompilerParams(
            dimension_semantics=(pltpu.ARBITRARY,),
            vmem_limit_bytes=VMEM_LIMIT_BYTES),
        cost_estimate=cost,
    )(*args)


# ---------------------------------- module ----------------------------------- #

class MSELossPallas:
    """Pallas port of BasicSR-style MSELoss (weighted_loss-decorated mse_loss)."""

    def __init__(self, loss_weight=1.0, reduction='mean'):
        if reduction not in ('none', 'mean', 'sum'):
            raise ValueError(f'Unsupported reduction mode: {reduction}.')
        self.loss_weight = loss_weight
        self.reduction = reduction

    def __call__(self, pred, target, weight=None):
        # Match the PyTorch module's 2D -> (1, 1, H, W) promotion.
        if target.ndim == 2:
            target = target.reshape(1, 1, *target.shape)
        if weight is not None and weight.ndim == 2:
            weight = weight.reshape(1, 1, *weight.shape)

        if target.shape != pred.shape:
            target = jnp.broadcast_to(target, pred.shape)
        if weight is not None and weight.shape != pred.shape:
            # TODO(synk): stream un-broadcast C==1 weights via a revisiting
            # index_map instead of materializing the broadcast copy in HBM.
            weight = jnp.broadcast_to(weight, pred.shape)

        n = int(pred.size)
        p2, rows = _to_lane_slab(pred)
        t2, _ = _to_lane_slab(target)
        w2 = _to_lane_slab(weight)[0] if weight is not None else None

        if self.reduction == 'none':
            out2d = _elementwise(p2, t2, w2, pred.dtype)
            out = out2d.reshape(-1)[:n].reshape(pred.shape)
            return self.loss_weight * out

        splits, block_rows, steps = _plan(rows, _num_tensorcores())
        if weight is None:
            sq_sum = _reduce(p2, t2, None, splits=splits, block_rows=block_rows,
                             steps=steps, rows_total=rows)
            loss = sq_sum if self.reduction == 'sum' else sq_sum / jnp.float32(n)
        else:
            sq_sum, w_sum = _reduce(p2, t2, w2, splits=splits, block_rows=block_rows,
                                    steps=steps, rows_total=rows)
            # BasicSR weight_reduce_loss: mean = sum(w*(p-t)^2) / sum(broadcast w)
            # (no epsilon; weights summing to 0 divide by zero — matches reference).
            loss = sq_sum if self.reduction == 'sum' else sq_sum / w_sum
        return (self.loss_weight * loss).astype(pred.dtype)


# ---------------------------------- main ------------------------------------ #

if __name__ == "__main__":
    key = jax.random.PRNGKey(0)
    k1, k2, k3, k4 = jax.random.split(key, 4)

    N, C, H, W = 2, 4, 16, 16
    pred = jax.random.normal(k1, (N, C, H, W), dtype=jnp.float32)
    target = jax.random.normal(k2, (N, C, H, W), dtype=jnp.float32)
    weight = jax.random.uniform(k3, (N, C, H, W), dtype=jnp.float32)
    weight1 = jax.random.uniform(k4, (N, 1, H, W), dtype=jnp.float32)

    # default: mean, no weight
    out_mean = jax.block_until_ready(MSELossPallas(reduction='mean')(pred, target))
    ref_mean = jnp.mean((pred - target) ** 2)
    assert jnp.allclose(out_mean, ref_mean, rtol=1e-5, atol=1e-5)

    # sum
    out_sum = jax.block_until_ready(MSELossPallas(reduction='sum')(pred, target))
    assert jnp.allclose(out_sum, jnp.sum((pred - target) ** 2), rtol=1e-5, atol=1e-5)

    # none (elementwise), unweighted and weighted
    out_none = jax.block_until_ready(MSELossPallas(reduction='none')(pred, target))
    assert jnp.allclose(out_none, (pred - target) ** 2, rtol=1e-5, atol=1e-5)

    out_none_w = jax.block_until_ready(
        MSELossPallas(reduction='none')(pred, target, weight))
    assert jnp.allclose(out_none_w, weight * (pred - target) ** 2,
                        rtol=1e-5, atol=1e-5)

    # mean with full (N, C, H, W) weight: sum(w * d^2) / sum(w)
    out_wmean = jax.block_until_ready(
        MSELossPallas(reduction='mean')(pred, target, weight))
    ref_wmean = jnp.sum(weight * (pred - target) ** 2) / jnp.sum(weight)
    assert jnp.allclose(out_wmean, ref_wmean, rtol=1e-5, atol=1e-5)

    # mean with single-channel (N, 1, H, W) weight: sum(w_b * d^2) / (sum(w) * C)
    out_wmean1 = jax.block_until_ready(
        MSELossPallas(reduction='mean')(pred, target, weight1))
    wb = jnp.broadcast_to(weight1, pred.shape)
    ref_wmean1 = jnp.sum(wb * (pred - target) ** 2) / (jnp.sum(weight1) * C)
    assert jnp.allclose(out_wmean1, ref_wmean1, rtol=1e-5, atol=1e-5)

    print("KERNEL_OK")
</pallas_src>

<mosaic_0001>
module attributes {stable_mosaic.version = 11 : i64} {
  func.func @kernel(%arg0: i32, %arg1: i32, %arg2: memref<16x128xf32, #tpu.memory_space<vmem>>, %arg3: memref<16x128xf32, #tpu.memory_space<vmem>>, %arg4: memref<1x1x1xf32, #tpu.memory_space<vmem>>, %arg5: memref<8x128xf32, #tpu.memory_space<vmem>>) attributes {dimension_semantics = [#tpu.dimension_semantics<arbitrary>, #tpu.dimension_semantics<arbitrary>], iteration_bounds = array<i64: 1, 1>, scalar_prefetch = 0 : i64, scratch_operands = 1 : i64, tpu.core_type = #tpu.core_type<tc>, window_params = [{transform_indices = @transform_0, window_bounds = array<i64: 16, 128>}, {transform_indices = @transform_1, window_bounds = array<i64: 16, 128>}, {transform_indices = @transform_2, window_bounds = array<i64: 1, 1, 1>}]} {
    %c0_i32 = arith.constant 0 : i32
    %0 = arith.cmpi eq, %arg1, %c0_i32 : i32
    %1 = arith.extui %0 : i1 to i32
    %c0_i32_0 = arith.constant 0 : i32
    %2 = arith.cmpi ne, %1, %c0_i32_0 : i32
    scf.if %2 {
      %cst_10 = arith.constant 0.000000e+00 : f32
      %15 = vector.broadcast %cst_10 : f32 to vector<8x128xf32>
      %c0_11 = arith.constant 0 : index
      %c0_12 = arith.constant 0 : index
      %16 = vector.load %arg5[%c0_11, %c0_12] : memref<8x128xf32, #tpu.memory_space<vmem>>, vector<8x128xf32>
      tpu.vector_store %arg5[%c0_11, %c0_12], %15 {strides = array<i32>} : memref<8x128xf32, #tpu.memory_space<vmem>>, vector<8x128xf32>,
    } else {
    }
    %c0 = arith.constant 0 : index
    %c0_1 = arith.constant 0 : index
    %3 = vector.load %arg2[%c0, %c0_1] : memref<16x128xf32, #tpu.memory_space<vmem>>, vector<16x128xf32>
    %c0_2 = arith.constant 0 : index
    %c0_3 = arith.constant 0 : index
    %4 = vector.load %arg3[%c0_2, %c0_3] : memref<16x128xf32, #tpu.memory_space<vmem>>, vector<16x128xf32>
    %5 = arith.subf %3, %4 : vector<16x128xf32>
    %6 = arith.mulf %5, %5 : vector<16x128xf32>
    %c0_4 = arith.constant 0 : index
    %c0_5 = arith.constant 0 : index
    %7 = vector.load %arg5[%c0_4, %c0_5] : memref<8x128xf32, #tpu.memory_space<vmem>>, vector<8x128xf32>
    %8 = vector.shape_cast %6 : vector<16x128xf32> to vector<2x8x128xf32>
    %cst = arith.constant dense<0.000000e+00> : vector<8x128xf32>
    %9 = vector.multi_reduction <add>, %8, %cst [0] : vector<2x8x128xf32> to vector<8x128xf32>
    %10 = arith.addf %7, %9 : vector<8x128xf32>
    %c0_6 = arith.constant 0 : index
    %c0_7 = arith.constant 0 : index
    %11 = vector.load %arg5[%c0_6, %c0_7] : memref<8x128xf32, #tpu.memory_space<vmem>>, vector<8x128xf32>
    tpu.vector_store %arg5[%c0_6, %c0_7], %10 {strides = array<i32>} : memref<8x128xf32, #tpu.memory_space<vmem>>, vector<8x128xf32>,
    %c0_i32_8 = arith.constant 0 : i32
    %12 = arith.cmpi eq, %arg1, %c0_i32_8 : i32
    %13 = arith.extui %12 : i1 to i32
    %c0_i32_9 = arith.constant 0 : i32
    %14 = arith.cmpi ne, %13, %c0_i32_9 : i32
    scf.if %14 {
      %c0_10 = arith.constant 0 : index
      %c0_11 = arith.constant 0 : index
      %15 = vector.load %arg5[%c0_10, %c0_11] : memref<8x128xf32, #tpu.memory_space<vmem>>, vector<8x128xf32>
      %16 = vector.shape_cast %15 : vector<8x128xf32> to vector<1x8x128xf32>
      %cst_12 = arith.constant dense<0.000000e+00> : vector<1xf32>
      %17 = vector.multi_reduction <add>, %16, %cst_12 [1, 2] : vector<1x8x128xf32> to vector<1xf32>
      %18 = vector.shape_cast %17 : vector<1xf32> to vector<1x1x1xf32>
      %19 = vector.extract %18[0, 0, 0] : f32 from vector<1x1x1xf32>
      %20 = vector.broadcast %19 : f32 to vector<1x1x1xf32>
      %c0_13 = arith.constant 0 : index
      %c0_14 = arith.constant 0 : index
      %c0_15 = arith.constant 0 : index
      %21 = vector.load %arg4[%c0_13, %c0_14, %c0_15] : memref<1x1x1xf32, #tpu.memory_space<vmem>>, vector<1x1x1xf32>
      tpu.vector_store %arg4[%c0_13, %c0_14, %c0_15], %20 {strides = array<i32>} : memref<1x1x1xf32, #tpu.memory_space<vmem>>, vector<1x1x1xf32>,
    } else {
    }
    return
  }
  func.func @transform_0(%arg0: i32, %arg1: i32) -> (i32, i32) {
    %c1_i32 = arith.constant 1 : i32
    %0 = arith.muli %arg0, %c1_i32 : i32
    %1 = arith.addi %0, %arg1 : i32
    %c0_i32 = arith.constant 0 : i32
    %c0_i32_0 = arith.constant 0 : i32
    return %1, %c0_i32 : i32, i32
  }
  func.func @transform_1(%arg0: i32, %arg1: i32) -> (i32, i32) {
    %c1_i32 = arith.constant 1 : i32
    %0 = arith.muli %arg0, %c1_i32 : i32
    %1 = arith.addi %0, %arg1 : i32
    %c0_i32 = arith.constant 0 : i32
    %c0_i32_0 = arith.constant 0 : i32
    return %1, %c0_i32 : i32, i32
  }
  func.func @transform_2(%arg0: i32, %arg1: i32) -> (i32, i32, i32) {
    %c0_i32 = arith.constant 0 : i32
    %c0_i32_0 = arith.constant 0 : i32
    %c0_i32_1 = arith.constant 0 : i32
    return %arg0, %c0_i32, %c0_i32_0 : i32, i32, i32
  }
}

</mosaic_0001>

<llo_original>
// kernel: tpu_custom_call.1
$region0: #{tpu_custom_call.1}
  #allocation0 [shape = 'u32[]', space=smem, size = 0x4, offset = 0x4, fixed_abs, tag = 'smem constant byte address 0x4 - core index']
  #allocation1 [shape = 'u32[144,128]{1,0:T(1,128)}', space=vmem, size = 0x12000, scoped, tag = 'internal scratch']
  #allocation2 [shape = 'f32[8,128]{1,0:T(8,128)}', space=vmem, size = 0x1000, scoped, tag = 'scratch operand']
  %s0 = inlined_call_operand.hbm [shape: f32[16,128], index: 0, kind: input, shape index: {}]
  %s1 = inlined_call_operand.hbm [shape: f32[16,128], index: 1, kind: input, shape index: {}]
  %s2 = inlined_call_operand.hbm [shape: f32[1,1,1], index: 2, kind: output, shape index: {}]
  %s3 = sld [smem:[#allocation0]]
  $region34: #{tpu_custom_call.1} parent=0
    _
  %s5 = ssub.s32 1, %s3
  %s6 = scalar_select 0, %s5, %s3
  $region1: #{tpu_custom_call.1} parent=0
    #allocation3 [shape = 'u8[8192]{0}', space=vmem, size = 0x2000, scoped, tag = 'input window, operand 0, single buffered']
    #allocation4 [shape = 's32[1]{0}', space=sflag, size = 0x4, scoped, tag = 'scoped memory for tpu_custom_call.1']
    #allocation5 [shape = 's32[1]{0}', space=sflag, size = 0x4, scoped, tag = 'scoped memory for tpu_custom_call.1']
    #allocation6 [shape = 'u8[8192]{0}', space=vmem, size = 0x2000, scoped, tag = 'input window, operand 1, single buffered']
    #allocation7 [shape = 's32[1]{0}', space=sflag, size = 0x4, scoped, tag = 'scoped memory for tpu_custom_call.1']
    #allocation8 [shape = 'u8[512]{0}', space=vmem, size = 0x400, scoped, tag = 'output window, operand 0, single buffered']
    %7 = vsyncpa [#allocation4], 0
    %8 = vsyncpa [#allocation7], 0
    %9 = vsyncpa [#allocation5], 0
    // Predicated region
    $region2: #{tpu_custom_call.1} parent=1 // pred_check
      _
    $region3: #{tpu_custom_call.1} parent=1 // pred_check_branch
      %11 = sbr.rel (0) target = $region5
    $region4: #{tpu_custom_call.1} parent=1 // pred_region
      %s12 = sadd.s32 0, 0
      %s13 = smul.u32 2, %s12
      %s15 = ssub.s32 256, 256
      %16 = vsyncadd [#allocation4], %s15
      %s17 = smul.addr %s13, 128
      %s18 = scalar_lea.hbm %s0, %s17
      %s19 = sshll.u32 [#allocation3], 4
      %s20 = int_to_ptr.vmem [resolvable:$true] %s19
      %25 = dma.hbm_to_vmem [thread:$0]  %s18, 256, %s20, [#allocation4], 128, 128, 8
    $region5: #{tpu_custom_call.1} parent=1 // pred_fallthru
      _
    // Predicated region
    $region6: #{tpu_custom_call.1} parent=1 // pred_check
      _
    $region7: #{tpu_custom_call.1} parent=1 // pred_check_branch
      %27 = sbr.rel (0) target = $region9
    $region8: #{tpu_custom_call.1} parent=1 // pred_region
      %s28 = sadd.s32 0, 0
      %s29 = smul.u32 2, %s28
      %s31 = ssub.s32 256, 256
      %32 = vsyncadd [#allocation7], %s31
      %s33 = smul.addr %s29, 128
      %s34 = scalar_lea.hbm %s1, %s33
      %s35 = sshll.u32 [#allocation6], 4
      %s36 = int_to_ptr.vmem [resolvable:$true] %s35
      %41 = dma.hbm_to_vmem [thread:$0]  %s34, 256, %s36, [#allocation7], 128, 128, 8
    $region9: #{tpu_custom_call.1} parent=1 // pred_fallthru
      _
    // Predicated region
    $region10: #{tpu_custom_call.1} parent=1 // pred_check
      _
    $region11: #{tpu_custom_call.1} parent=1 // pred_check_branch
      %43 = sbr.rel (0) target = $region13
    $region12: #{tpu_custom_call.1} parent=1 // pred_region
      %44 = dma.done [#allocation4], 256
    $region13: #{tpu_custom_call.1} parent=1 // pred_fallthru
      _
    // Predicated region
    $region14: #{tpu_custom_call.1} parent=1 // pred_check
      _
    $region15: #{tpu_custom_call.1} parent=1 // pred_check_branch
      %46 = sbr.rel (0) target = $region17
    $region16: #{tpu_custom_call.1} parent=1 // pred_region
      %47 = dma.done [#allocation7], 256
    $region17: #{tpu_custom_call.1} parent=1 // pred_fallthru
      _
    %s48 = sadd.s32 0, 0
    %s49 = smul.u32 2, %s48
    %s50 = sadd.s32 0, 0
    %s51 = smul.u32 2, %s50
    %p52 = scmp.eq.s32.totalorder 0, 0
    // Predicated region
    $region18: #{tpu_custom_call.1} parent=1 // pred_check
      %p53 = pneg %p52
    $region19: #{tpu_custom_call.1} parent=1 // pred_check_branch
      %55 = sbr.rel (%p53) target = $region21
    $region20: #{tpu_custom_call.1} parent=1 // pred_region
      %56 = vst [vmem:[#allocation2] sm:$0xff] 0.0
    $region21: #{tpu_custom_call.1} parent=1 // pred_fallthru
      _
    %v57 = vld [vmem:[#allocation3] sm:$0xff]
    %v58 = vld [vmem:[#allocation3 + $0x8] sm:$0xff]
    %v59 = vld [vmem:[#allocation6] sm:$0xff]
    %v60 = vld [vmem:[#allocation6 + $0x8] sm:$0xff]
    %v61 = vsub.f32 %v57, %v59
    %v62 = vsub.f32 %v58, %v60
    %v63 = vmul.f32 %v61, %v61
    %v64 = vmul.f32 %v62, %v62
    %v65 = vld [vmem:[#allocation2] sm:$0xff]
    %v66 = vadd.f32 %v63, %v64
    %v67 = vadd.f32 %v65, %v66
    %68 = vst [vmem:[#allocation2] sm:$0xff] %v67
    // Predicated region
    $region22: #{tpu_custom_call.1} parent=1 // pred_check
      %p69 = pneg %p52
    $region23: #{tpu_custom_call.1} parent=1 // pred_check_branch
      %71 = sbr.rel (%p69) target = $region25
    $region24: #{tpu_custom_call.1} parent=1 // pred_region
      %v72 = vld [vmem:[#allocation2] sm:$0xff]
      %73 = vadd.xlane.f32.xlu0 %v72
      %v74 = vpop.xlane.xlu0 %73
      %v75 = vrot.slane %v74, 4
      %v76 = vadd.f32 %v74, %v75
      %v77 = vrot.slane %v76, 2
      %v78 = vadd.f32 %v76, %v77
      %v79 = vrot.slane %v78, 1
      %v80 = vadd.f32 %v78, %v79
      %s81 = vtos %v80
      %v82 = vstv %s81
      %vm83 = vcmask 0
      %84 = vst.msk [vmem:[#allocation8] sm:$0x1] %vm83, %v82
    $region25: #{tpu_custom_call.1} parent=1 // pred_fallthru
      _
    // Predicated region
    $region26: #{tpu_custom_call.1} parent=1 // pred_check
      _
    $region27: #{tpu_custom_call.1} parent=1 // pred_check_branch
      %86 = sbr.rel (0) target = $region29
    $region28: #{tpu_custom_call.1} parent=1 // pred_region
      %s88 = ssub.s32 16, 16
      %89 = vsyncadd [#allocation5], %s88
      %s91 = sshll.u32 [#allocation8], 4
      %s92 = int_to_ptr.vmem [resolvable:$true] %s91
      %94 = dma.vmem_to_hbm [thread:$0]  %s92, 16, %s2, [#allocation5]
    $region29: #{tpu_custom_call.1} parent=1 // pred_fallthru
      _
    // Predicated region
    $region30: #{tpu_custom_call.1} parent=1 // pred_check
      _
    $region31: #{tpu_custom_call.1} parent=1 // pred_check_branch
      %96 = sbr.rel (0) target = $region33
    $region32: #{tpu_custom_call.1} parent=1 // pred_region
      %97 = dma.done [#allocation5], 16
    $region33: #{tpu_custom_call.1} parent=1 // pred_fallthru
      _
    %98 = vsyncpa [#allocation4], 1
    %99 = vsyncpa [#allocation7], 1
    %100 = vsyncpa [#allocation5], 1

</llo_original>
